<compile_context>
chip_gen: v7x
topology: tpu7x:2x2x1
jax: 0.10.0
libtpu: 0.0.40
codegen_flags: <defaults>
</compile_context>

<pallas_src>
import functools

import jax
import jax.numpy as jnp
from jax.experimental import pallas as pl
from jax.experimental.pallas import tpu as pltpu

LN_EPS = 1e-5   # PyTorch nn.LayerNorm default
CHUNK = 128     # rows per inner chunk == output lane width


def regress_pred_kernel(x_ref, w1t_ref, b1_ref, g_ref, beta_ref, w2_ref,
                        b2_ref, o_ref):
    # Parameters are tiny; load once per grid step.
    w1t = w1t_ref[...].astype(jnp.float32)     # (H, K)  = W1^T
    b1 = b1_ref[...].astype(jnp.float32)       # (H, 1)
    gamma = g_ref[...].astype(jnp.float32)     # (H, 1)
    beta = beta_ref[...].astype(jnp.float32)   # (H, 1)
    w2 = w2_ref[...].astype(jnp.float32)       # (H, 1)
    b2 = b2_ref[0, 0]                          # f32 scalar from SMEM

    num_chunks = x_ref.shape[0] // CHUNK       # static: block_rows // 128

    # Short static loop (<= 8 iters at block_rows=1024). Each chunk's values
    # die at its store, so the unrolled body keeps vreg pressure bounded.
    for c in range(num_chunks):
        # (CHUNK, K) rows of the input tile.
        x_c = x_ref[pl.ds(c * CHUNK, CHUNK), :].astype(jnp.float32)

        # --- Linear 1 (transposed): h^T = W1^T @ x_c^T -> (H, CHUNK) ---
        # Contract the last dims of both operands (the q @ k^T pattern).
        h = jax.lax.dot_general(
            w1t, x_c, (((1,), (1,)), ((), ())),
            preferred_element_type=jnp.float32)
        h = jnp.maximum(h + b1, 0.0)           # bias + ReLU (VPU)

        # --- LayerNorm over the hidden axis (sublanes, population variance) ---
        mean = jnp.mean(h, axis=0, keepdims=True)            # (1, CHUNK)
        cen = h - mean
        var = jnp.mean(cen * cen, axis=0, keepdims=True)
        inv = jax.lax.rsqrt(var + LN_EPS)
        hn = cen * inv * gamma + beta

        # --- Linear 2 (H -> 1) as VPU mul + sublane reduce -> (1, CHUNK) ---
        y = jnp.sum(hn * w2, axis=0, keepdims=True) + b2

        # Lane-dense store: one full 128-lane output row per chunk.
        o_ref[pl.ds(c, 1), :] = y.astype(o_ref.dtype)


@functools.partial(jax.jit, static_argnames=("block_rows",))
def regress_pred(x, params, *, block_rows=1024):
    """x: [..., num_inputs]  ->  [..., 1]"""
    w1, b1, gamma, beta, w2, b2 = params
    num_inputs = x.shape[-1]
    num_hiddens = w1.shape[1]
    lead_shape = x.shape[:-1]

    x2 = x.reshape(-1, num_inputs)
    n_rows = x2.shape[0]

    # Tile-size policy: the lane-dense output block (block_rows/128, 128) must
    # either have a sublane count that's a multiple of 8 (block_rows % 1024 == 0)
    # or span the whole padded array (single grid step for small inputs).
    assert block_rows % 1024 == 0, "block_rows must be a multiple of 1024"
    n_pad128 = pl.cdiv(n_rows, CHUNK) * CHUNK
    if n_pad128 <= block_rows:
        block_rows = n_pad128                  # single block covers everything
    n_blocks = pl.cdiv(n_rows, block_rows)
    n_pad = n_blocks * block_rows
    if n_pad != n_rows:
        x2 = jnp.pad(x2, ((0, n_pad - n_rows), (0, 0)))

    # Transposed / column-oriented parameter layouts for the kernel.
    w1t = w1.T                                        # (H, K), tiny
    b1_col = b1.reshape(num_hiddens, 1)
    gamma_col = gamma.reshape(num_hiddens, 1)
    beta_col = beta.reshape(num_hiddens, 1)
    w2_col = w2.reshape(num_hiddens, 1)
    b2_2d = b2.reshape(1, 1).astype(jnp.float32)      # SMEM scalar

    out = pl.pallas_call(
        regress_pred_kernel,
        out_shape=jax.ShapeDtypeStruct((n_pad // CHUNK, CHUNK), x.dtype),
        grid_spec=pltpu.PrefetchScalarGridSpec(
            num_scalar_prefetch=0,
            grid=(n_blocks,),
            in_specs=[
                pl.BlockSpec((block_rows, num_inputs), lambda i: (i, 0)),
                pl.BlockSpec((num_hiddens, num_inputs), lambda i: (0, 0)),
                pl.BlockSpec((num_hiddens, 1), lambda i: (0, 0)),
                pl.BlockSpec((num_hiddens, 1), lambda i: (0, 0)),
                pl.BlockSpec((num_hiddens, 1), lambda i: (0, 0)),
                pl.BlockSpec((num_hiddens, 1), lambda i: (0, 0)),
                pl.BlockSpec(memory_space=pltpu.MemorySpace.SMEM),
            ],
            out_specs=pl.BlockSpec((block_rows // CHUNK, CHUNK),
                                   lambda i: (i, 0)),
        ),
        compiler_params=pltpu.CompilerParams(
            dimension_semantics=("parallel",)),   # shards rows across TCs (v7x)
    )(x2, w1t, b1_col, gamma_col, beta_col, w2_col, b2_2d)

    return out.reshape(-1)[:n_rows].reshape(*lead_shape, 1)


def init_params(key, num_inputs, num_hiddens, dtype=jnp.float32):
    """Mimics nn.Linear defaults (uniform ±1/sqrt(fan_in)) and nn.LayerNorm
    defaults (gamma=1, beta=0)."""
    k1, k2, k3, k4 = jax.random.split(key, 4)
    lim1 = 1.0 / jnp.sqrt(num_inputs)
    lim2 = 1.0 / jnp.sqrt(num_hiddens)
    w1 = jax.random.uniform(k1, (num_inputs, num_hiddens), dtype,
                            minval=-lim1, maxval=lim1)
    b1 = jax.random.uniform(k2, (num_hiddens,), dtype,
                            minval=-lim1, maxval=lim1)
    gamma = jnp.ones((num_hiddens,), dtype)
    beta = jnp.zeros((num_hiddens,), dtype)
    w2 = jax.random.uniform(k3, (num_hiddens, 1), dtype,
                            minval=-lim2, maxval=lim2)
    b2 = jax.random.uniform(k4, (1,), dtype, minval=-lim2, maxval=lim2)
    return (w1, b1, gamma, beta, w2, b2)


def _reference(x, params):
    """Plain-JAX reference of the PyTorch forward pass."""
    w1, b1, gamma, beta, w2, b2 = params
    h = jnp.maximum(x @ w1 + b1, 0.0)
    mean = jnp.mean(h, axis=-1, keepdims=True)
    var = jnp.mean((h - mean) ** 2, axis=-1, keepdims=True)
    hn = (h - mean) / jnp.sqrt(var + LN_EPS) * gamma + beta
    return hn @ w2 + b2


if __name__ == "__main__":
    num_inputs, num_hiddens = 32, 32

    key = jax.random.PRNGKey(0)
    kx, kp, kx2 = jax.random.split(key, 3)
    params = init_params(kp, num_inputs, num_hiddens)

    # Small case (single grid block, padded to 128 rows internally).
    batch, seq = 2, 8
    x = jax.random.normal(kx, (batch, seq, num_inputs), jnp.float32)
    y = jax.block_until_ready(regress_pred(x, params))
    y_ref = _reference(x, params)
    assert y.shape == (batch, seq, 1), y.shape
    assert jnp.allclose(y, y_ref, atol=2e-5, rtol=2e-5), (
        float(jnp.max(jnp.abs(y - y_ref))))

    # Multi-block case exercising the padded, 1024-row-tile pipeline path.
    batch2, seq2 = 3, 1000     # 3000 rows -> 3 grid steps, padded to 3072
    x_big = jax.random.normal(kx2, (batch2, seq2, num_inputs), jnp.float32)
    y_big = jax.block_until_ready(regress_pred(x_big, params))
    y_big_ref = _reference(x_big, params)
    assert y_big.shape == (batch2, seq2, 1), y_big.shape
    assert jnp.allclose(y_big, y_big_ref, atol=2e-5, rtol=2e-5), (
        float(jnp.max(jnp.abs(y_big - y_big_ref))))

    print("KERNEL_OK")
</pallas_src>

<mosaic_0001>
module attributes {stable_mosaic.version = 11 : i64} {
  func.func @regress_pred_kernel(%arg0: i32, %arg1: memref<128x32xf32, #tpu.memory_space<vmem>>, %arg2: memref<32x32xf32, #tpu.memory_space<vmem>>, %arg3: memref<32x1xf32, #tpu.memory_space<vmem>>, %arg4: memref<32x1xf32, #tpu.memory_space<vmem>>, %arg5: memref<32x1xf32, #tpu.memory_space<vmem>>, %arg6: memref<32x1xf32, #tpu.memory_space<vmem>>, %arg7: memref<1x1xf32, #tpu.memory_space<smem>>, %arg8: memref<1x128xf32, #tpu.memory_space<vmem>>) attributes {dimension_semantics = [#tpu.dimension_semantics<parallel>], iteration_bounds = array<i64: 1>, scalar_prefetch = 0 : i64, scratch_operands = 0 : i64, tpu.core_type = #tpu.core_type<tc>, window_params = [{transform_indices = @transform_0, window_bounds = array<i64: 128, 32>}, {pipeline_mode = #tpu.pipeline_mode<synchronous>, transform_indices = @transform_1, window_bounds = array<i64: 32, 32>}, {pipeline_mode = #tpu.pipeline_mode<synchronous>, transform_indices = @transform_2, window_bounds = array<i64: 32, 1>}, {pipeline_mode = #tpu.pipeline_mode<synchronous>, transform_indices = @transform_3, window_bounds = array<i64: 32, 1>}, {pipeline_mode = #tpu.pipeline_mode<synchronous>, transform_indices = @transform_4, window_bounds = array<i64: 32, 1>}, {pipeline_mode = #tpu.pipeline_mode<synchronous>, transform_indices = @transform_5, window_bounds = array<i64: 32, 1>}, {transform_indices = @transform_6, window_bounds = array<i64: 1, 1>}, {transform_indices = @transform_7, window_bounds = array<i64: 1, 128>}]} {
    %c0 = arith.constant 0 : index
    %c0_0 = arith.constant 0 : index
    %0 = vector.load %arg2[%c0, %c0_0] : memref<32x32xf32, #tpu.memory_space<vmem>>, vector<32x32xf32>
    %c0_1 = arith.constant 0 : index
    %c0_2 = arith.constant 0 : index
    %1 = vector.load %arg3[%c0_1, %c0_2] : memref<32x1xf32, #tpu.memory_space<vmem>>, vector<32x1xf32>
    %c0_3 = arith.constant 0 : index
    %c0_4 = arith.constant 0 : index
    %2 = vector.load %arg4[%c0_3, %c0_4] : memref<32x1xf32, #tpu.memory_space<vmem>>, vector<32x1xf32>
    %c0_5 = arith.constant 0 : index
    %c0_6 = arith.constant 0 : index
    %3 = vector.load %arg5[%c0_5, %c0_6] : memref<32x1xf32, #tpu.memory_space<vmem>>, vector<32x1xf32>
    %c0_7 = arith.constant 0 : index
    %c0_8 = arith.constant 0 : index
    %4 = vector.load %arg6[%c0_7, %c0_8] : memref<32x1xf32, #tpu.memory_space<vmem>>, vector<32x1xf32>
    %c0_9 = arith.constant 0 : index
    %c0_10 = arith.constant 0 : index
    %5 = memref.load %arg7[%c0_9, %c0_10] : memref<1x1xf32, #tpu.memory_space<smem>>
    %c0_11 = arith.constant 0 : index
    %c0_12 = arith.constant 0 : index
    %6 = vector.load %arg1[%c0_11, %c0_12] : memref<128x32xf32, #tpu.memory_space<vmem>>, vector<128x32xf32>
    %cst = arith.constant dense<0.000000e+00> : vector<32x128xf32>
    %7 = tpu.matmul %0, %6, %cst {dimension_numbers = #tpu.dot_dimension_numbers<[1], [1], [0], [0], [0, 0, 1, 0], [], []>} : vector<32x32xf32>, vector<128x32xf32>, vector<32x128xf32> -> vector<32x128xf32>
    %8 = vector.broadcast %1 : vector<32x1xf32> to vector<32x128xf32>
    %9 = arith.addf %7, %8 : vector<32x128xf32>
    %cst_13 = arith.constant 0.000000e+00 : f32
    %10 = vector.broadcast %cst_13 : f32 to vector<32x128xf32>
    %11 = arith.maximumf %9, %10 : vector<32x128xf32>
    %cst_14 = arith.constant dense<0.000000e+00> : vector<128xf32>
    %12 = vector.multi_reduction <add>, %11, %cst_14 [0] : vector<32x128xf32> to vector<128xf32>
    %13 = vector.shape_cast %12 : vector<128xf32> to vector<1x128xf32>
    %cst_15 = arith.constant 3.200000e+01 : f32
    %14 = vector.broadcast %cst_15 : f32 to vector<1x128xf32>
    %15 = arith.divf %13, %14 : vector<1x128xf32>
    %16 = vector.broadcast %15 : vector<1x128xf32> to vector<32x128xf32>
    %17 = arith.subf %11, %16 : vector<32x128xf32>
    %18 = arith.mulf %17, %17 : vector<32x128xf32>
    %cst_16 = arith.constant dense<0.000000e+00> : vector<128xf32>
    %19 = vector.multi_reduction <add>, %18, %cst_16 [0] : vector<32x128xf32> to vector<128xf32>
    %20 = vector.shape_cast %19 : vector<128xf32> to vector<1x128xf32>
    %cst_17 = arith.constant 3.200000e+01 : f32
    %21 = vector.broadcast %cst_17 : f32 to vector<1x128xf32>
    %22 = arith.divf %20, %21 : vector<1x128xf32>
    %cst_18 = arith.constant 9.99999974E-6 : f32
    %23 = vector.broadcast %cst_18 : f32 to vector<1x128xf32>
    %24 = arith.addf %22, %23 : vector<1x128xf32>
    %25 = math.rsqrt %24 : vector<1x128xf32>
    %26 = vector.broadcast %25 : vector<1x128xf32> to vector<32x128xf32>
    %27 = arith.mulf %17, %26 : vector<32x128xf32>
    %28 = vector.broadcast %2 : vector<32x1xf32> to vector<32x128xf32>
    %29 = arith.mulf %27, %28 : vector<32x128xf32>
    %30 = vector.broadcast %3 : vector<32x1xf32> to vector<32x128xf32>
    %31 = arith.addf %29, %30 : vector<32x128xf32>
    %32 = vector.broadcast %4 : vector<32x1xf32> to vector<32x128xf32>
    %33 = arith.mulf %31, %32 : vector<32x128xf32>
    %cst_19 = arith.constant dense<0.000000e+00> : vector<128xf32>
    %34 = vector.multi_reduction <add>, %33, %cst_19 [0] : vector<32x128xf32> to vector<128xf32>
    %35 = vector.shape_cast %34 : vector<128xf32> to vector<1x128xf32>
    %36 = vector.broadcast %5 : f32 to vector<1x128xf32>
    %37 = arith.addf %35, %36 : vector<1x128xf32>
    %c0_20 = arith.constant 0 : index
    %c0_21 = arith.constant 0 : index
    %38 = vector.load %arg8[%c0_20, %c0_21] : memref<1x128xf32, #tpu.memory_space<vmem>>, vector<1x128xf32>
    tpu.vector_store %arg8[%c0_20, %c0_21], %37 {strides = array<i32>} : memref<1x128xf32, #tpu.memory_space<vmem>>, vector<1x128xf32>,
    return
  }
  func.func @transform_0(%arg0: i32) -> (i32, i32) {
    %c0_i32 = arith.constant 0 : i32
    %c0_i32_0 = arith.constant 0 : i32
    return %arg0, %c0_i32 : i32, i32
  }
  func.func @transform_1(%arg0: i32) -> (i32, i32) {
    %c0_i32 = arith.constant 0 : i32
    %c0_i32_0 = arith.constant 0 : i32
    %c0_i32_1 = arith.constant 0 : i32
    return %c0_i32, %c0_i32_0 : i32, i32
  }
  func.func @transform_2(%arg0: i32) -> (i32, i32) {
    %c0_i32 = arith.constant 0 : i32
    %c0_i32_0 = arith.constant 0 : i32
    %c0_i32_1 = arith.constant 0 : i32
    return %c0_i32, %c0_i32_0 : i32, i32
  }
  func.func @transform_3(%arg0: i32) -> (i32, i32) {
    %c0_i32 = arith.constant 0 : i32
    %c0_i32_0 = arith.constant 0 : i32
    %c0_i32_1 = arith.constant 0 : i32
    return %c0_i32, %c0_i32_0 : i32, i32
  }
  func.func @transform_4(%arg0: i32) -> (i32, i32) {
    %c0_i32 = arith.constant 0 : i32
    %c0_i32_0 = arith.constant 0 : i32
    %c0_i32_1 = arith.constant 0 : i32
    return %c0_i32, %c0_i32_0 : i32, i32
  }
  func.func @transform_5(%arg0: i32) -> (i32, i32) {
    %c0_i32 = arith.constant 0 : i32
    %c0_i32_0 = arith.constant 0 : i32
    %c0_i32_1 = arith.constant 0 : i32
    return %c0_i32, %c0_i32_0 : i32, i32
  }
  func.func @transform_6(%arg0: i32) -> (i32, i32) {
    %c0_i32 = arith.constant 0 : i32
    %c0_i32_0 = arith.constant 0 : i32
    %c0_i32_1 = arith.constant 0 : i32
    return %c0_i32, %c0_i32_0 : i32, i32
  }
  func.func @transform_7(%arg0: i32) -> (i32, i32) {
    %c0_i32 = arith.constant 0 : i32
    %c0_i32_0 = arith.constant 0 : i32
    return %arg0, %c0_i32 : i32, i32
  }
}

</mosaic_0001>

<llo_original>
// kernel: regress_pred.1
$region0: #{regress_pred.1}
  #allocation0 [shape = 'u32[]', space=smem, size = 0x4, offset = 0x4, fixed_abs, tag = 'smem constant byte address 0x4 - core index']
  #allocation1 [shape = 'u32[144,128]{1,0:T(1,128)}', space=vmem, size = 0x12000, scoped, tag = 'internal scratch']
  #allocation2 [shape = 'f32[1,1]{1,0:T(1,128)S(6)}', space=smem, size = 0x200, scoped, tag = 'scoped memory for regress_pred.1']
  %s0 = inlined_call_operand.vmem [shape: f32[128,32], index: 0, kind: input, shape index: {}]
  %s1 = inlined_call_operand.vmem [shape: f32[32,32], index: 1, kind: input, shape index: {}]
  %s2 = inlined_call_operand.vmem [shape: f32[32,1], index: 2, kind: input, shape index: {}]
  %s3 = inlined_call_operand.vmem [shape: f32[32,1], index: 3, kind: input, shape index: {}]
  %s4 = inlined_call_operand.vmem [shape: f32[32,1], index: 4, kind: input, shape index: {}]
  %s5 = inlined_call_operand.vmem [shape: f32[32,1], index: 5, kind: input, shape index: {}]
  %s6 = inlined_call_operand.<no memory space> [shape: f32[1,1], index: 6, kind: input, shape index: {}]
  %s7 = inlined_call_operand.vmem [shape: f32[1,128], index: 7, kind: output, shape index: {}]
  %s8 = sld [smem:[#allocation0]]
  $region38: #{regress_pred.1} parent=0
    _
  %s10 = ssub.s32 1, %s8
  %s11 = scalar_select 0, %s10, %s8
  %12 = sst [smem:[#allocation2]] %s6
  // Predicated region
  $region2: #{regress_pred.1} parent=0 // pred_check
    _
  $region3: #{regress_pred.1} parent=0 // pred_check_branch
    %14 = sbr.rel (0) target = $region5
  $region4: #{regress_pred.1} parent=0 // pred_region
    _
  $region5: #{regress_pred.1} parent=0 // pred_fallthru
    _
  // Predicated region
  $region6: #{regress_pred.1} parent=0 // pred_check
    _
  $region7: #{regress_pred.1} parent=0 // pred_check_branch
    %16 = sbr.rel (0) target = $region9
  $region8: #{regress_pred.1} parent=0 // pred_region
    _
  $region9: #{regress_pred.1} parent=0 // pred_fallthru
    _
  // Predicated region
  $region10: #{regress_pred.1} parent=0 // pred_check
    _
  $region11: #{regress_pred.1} parent=0 // pred_check_branch
    %18 = sbr.rel (0) target = $region13
  $region12: #{regress_pred.1} parent=0 // pred_region
    _
  $region13: #{regress_pred.1} parent=0 // pred_fallthru
    _
  // Predicated region
  $region14: #{regress_pred.1} parent=0 // pred_check
    _
  $region15: #{regress_pred.1} parent=0 // pred_check_branch
    %20 = sbr.rel (0) target = $region17
  $region16: #{regress_pred.1} parent=0 // pred_region
    _
  $region17: #{regress_pred.1} parent=0 // pred_fallthru
    _
  // Predicated region
  $region18: #{regress_pred.1} parent=0 // pred_check
    _
  $region19: #{regress_pred.1} parent=0 // pred_check_branch
    %22 = sbr.rel (0) target = $region21
  $region20: #{regress_pred.1} parent=0 // pred_region
    _
  $region21: #{regress_pred.1} parent=0 // pred_fallthru
    _
  // Predicated region
  $region22: #{regress_pred.1} parent=0 // pred_check
    _
  $region23: #{regress_pred.1} parent=0 // pred_check_branch
    %24 = sbr.rel (0) target = $region25
  $region24: #{regress_pred.1} parent=0 // pred_region
    _
  $region25: #{regress_pred.1} parent=0 // pred_fallthru
    _
  // Predicated region
  $region26: #{regress_pred.1} parent=0 // pred_check
    _
  $region27: #{regress_pred.1} parent=0 // pred_check_branch
    %26 = sbr.rel (0) target = $region29
  $region28: #{regress_pred.1} parent=0 // pred_region
    _
  $region29: #{regress_pred.1} parent=0 // pred_fallthru
    _
  %v27 = vld [vmem:[%s1] sm:$0xff]
  %v28 = vld [vmem:[%s1 + $0x8] sm:$0xff]
  %v29 = vld [vmem:[%s1 + $0x10] sm:$0xff]
  %v30 = vld [vmem:[%s1 + $0x18] sm:$0xff]
  %v31 = vld [vmem:[%s2] sm:$0xff]
  %v32 = vld [vmem:[%s2 + $0x8] sm:$0xff]
  %v33 = vld [vmem:[%s2 + $0x10] sm:$0xff]
  %v34 = vld [vmem:[%s2 + $0x18] sm:$0xff]
  %v35 = vld [vmem:[%s3] sm:$0xff]
  %v36 = vld [vmem:[%s3 + $0x8] sm:$0xff]
  %v37 = vld [vmem:[%s3 + $0x10] sm:$0xff]
  %v38 = vld [vmem:[%s3 + $0x18] sm:$0xff]
  %v39 = vld [vmem:[%s4] sm:$0xff]
  %v40 = vld [vmem:[%s4 + $0x8] sm:$0xff]
  %v41 = vld [vmem:[%s4 + $0x10] sm:$0xff]
  %v42 = vld [vmem:[%s4 + $0x18] sm:$0xff]
  %v43 = vld [vmem:[%s5] sm:$0xff]
  %v44 = vld [vmem:[%s5 + $0x8] sm:$0xff]
  %v45 = vld [vmem:[%s5 + $0x10] sm:$0xff]
  %v46 = vld [vmem:[%s5 + $0x18] sm:$0xff]
  %s47 = sld [smem:[#allocation2]]
  %v48 = vld [vmem:[%s0] sm:$0xff]
  %v49 = vld [vmem:[%s0 + $0x8] sm:$0xff]
  %v50 = vld [vmem:[%s0 + $0x10] sm:$0xff]
  %v51 = vld [vmem:[%s0 + $0x18] sm:$0xff]
  %v52 = vld [vmem:[%s0 + $0x20] sm:$0xff]
  %v53 = vld [vmem:[%s0 + $0x28] sm:$0xff]
  %v54 = vld [vmem:[%s0 + $0x30] sm:$0xff]
  %v55 = vld [vmem:[%s0 + $0x38] sm:$0xff]
  %v56 = vld [vmem:[%s0 + $0x40] sm:$0xff]
  %v57 = vld [vmem:[%s0 + $0x48] sm:$0xff]
  %v58 = vld [vmem:[%s0 + $0x50] sm:$0xff]
  %v59 = vld [vmem:[%s0 + $0x58] sm:$0xff]
  %v60 = vld [vmem:[%s0 + $0x60] sm:$0xff]
  %v61 = vld [vmem:[%s0 + $0x68] sm:$0xff]
  %v62 = vld [vmem:[%s0 + $0x70] sm:$0xff]
  %v63 = vld [vmem:[%s0 + $0x78] sm:$0xff]
  %65 = vset.pattern.permute.xlu0 0
  %66 = vperm.xlu0 %65, %v31
  %v67 = vpop.permute.xlu0 %66
  %70 = vset.pattern.permute.xlu0 0
  %71 = vperm.xlu0 %70, %v32
  %v72 = vpop.permute.xlu0 %71
  %75 = vset.pattern.permute.xlu0 0
  %76 = vperm.xlu0 %75, %v33
  %v77 = vpop.permute.xlu0 %76
  %80 = vset.pattern.permute.xlu0 0
  %81 = vperm.xlu0 %80, %v34
  %v82 = vpop.permute.xlu0 %81
  %vm84 = vcmask 261120
  %v86 = vsel %vm84, %v27, 0
  %v89 = vsel %vm84, %v28, 0
  %v92 = vsel %vm84, %v29, 0
  %v95 = vsel %vm84, %v30, 0
  %v98 = vsel %vm84, %v48, 0
  %v101 = vsel %vm84, %v49, 0
  %v104 = vsel %vm84, %v50, 0
  %v107 = vsel %vm84, %v51, 0
  %v110 = vsel %vm84, %v52, 0
  %v113 = vsel %vm84, %v53, 0
  %v116 = vsel %vm84, %v54, 0
  %v119 = vsel %vm84, %v55, 0
  %v122 = vsel %vm84, %v56, 0
  %v125 = vsel %vm84, %v57, 0
  %v128 = vsel %vm84, %v58, 0
  %v131 = vsel %vm84, %v59, 0
  %v134 = vsel %vm84, %v60, 0
  %v137 = vsel %vm84, %v61, 0
  %v140 = vsel %vm84, %v62, 0
  %v143 = vsel %vm84, %v63, 0
  %145 = vmatprep.subr.mxu0 0.0
  %146 = vmatpush1.xpose.msra.mxu0 %v98
  %147 = vmatprep.subr.mxu0 0.0
  %148 = vmatpush1.xpose.msra.mxu0 %v101
  %149 = vmatprep.subr.mxu0 0.0
  %150 = vmatpush1.xpose.msra.mxu0 %v104
  %151 = vmatprep.subr.mxu0 0.0
  %152 = vmatpush1.xpose.msra.mxu0 %v107
  %153 = vmatprep.subr.mxu0 0.0
  %154 = vmatpush1.xpose.msra.mxu0 %v110
  %155 = vmatprep.subr.mxu0 0.0
  %156 = vmatpush1.xpose.msra.mxu0 %v113
  %157 = vmatprep.subr.mxu0 0.0
  %158 = vmatpush1.xpose.msra.mxu0 %v116
  %159 = vmatprep.subr.mxu0 0.0
  %160 = vmatpush1.xpose.msra.mxu0 %v119
  %161 = vmatprep.subr.mxu0 0.0
  %162 = vmatpush1.xpose.msra.mxu0 %v122
  %163 = vmatprep.subr.mxu0 0.0
  %164 = vmatpush1.xpose.msra.mxu0 %v125
  %165 = vmatprep.subr.mxu0 0.0
  %166 = vmatpush1.xpose.msra.mxu0 %v128
  %167 = vmatprep.subr.mxu0 0.0
  %168 = vmatpush1.xpose.msra.mxu0 %v131
  %169 = vmatprep.subr.mxu0 0.0
  %170 = vmatpush1.xpose.msra.mxu0 %v134
  %171 = vmatprep.subr.mxu0 0.0
  %172 = vmatpush1.xpose.msra.mxu0 %v137
  %173 = vmatprep.subr.mxu0 0.0
  %174 = vmatpush1.xpose.msra.mxu0 %v140
  %175 = vmatprep.subr.mxu0 0.0
  %176 = vmatpush1.xpose.msra.mxu0 %v143
  %177 = vmatprep.subr.mxu0 0.0
  %178 = vmatpush1.xpose.msra.mxu0 0.0
  %179 = vmatprep.subr.mxu0 0.0
  %180 = vmatpush1.xpose.msra.mxu0 0.0
  %181 = vmatprep.subr.mxu0 0.0
  %182 = vmatpush1.xpose.msra.mxu0 0.0
  %183 = vmatprep.subr.mxu0 0.0
  %184 = vmatpush1.xpose.msra.mxu0 0.0
  %185 = vmatprep.subr.mxu0 0.0
  %186 = vmatpush1.xpose.msra.mxu0 0.0
  %187 = vmatprep.subr.mxu0 0.0
  %188 = vmatpush1.xpose.msra.mxu0 0.0
  %189 = vmatprep.subr.mxu0 0.0
  %190 = vmatpush1.xpose.msra.mxu0 0.0
  %191 = vmatprep.subr.mxu0 0.0
  %192 = vmatpush1.xpose.msra.mxu0 0.0
  %193 = vmatprep.subr.mxu0 0.0
  %194 = vmatpush1.xpose.msra.mxu0 0.0
  %195 = vmatprep.subr.mxu0 0.0
  %196 = vmatpush1.xpose.msra.mxu0 0.0
  %197 = vmatprep.subr.mxu0 0.0
  %198 = vmatpush1.xpose.msra.mxu0 0.0
  %199 = vmatprep.subr.mxu0 0.0
  %200 = vmatpush1.xpose.msra.mxu0 0.0
  %201 = vmatprep.subr.mxu0 0.0
  %202 = vmatpush1.xpose.msra.mxu0 0.0
  %203 = vmatprep.subr.mxu0 0.0
  %204 = vmatpush1.xpose.msra.mxu0 0.0
  %205 = vmatprep.subr.mxu0 0.0
  %206 = vmatpush1.xpose.msra.mxu0 0.0
  %207 = vmatprep.subr.mxu0 0.0
  %208 = vmatpush1.xpose.msra.mxu0 0.0
  %209 = vmatprep.mubr.f32.mxu0 0.0
  %210 = vmatmul.mubr.f32.gmra.mrb[0].mxu0 %v86
  %v211 = vpop.f32.mrb[0].mxu0
  %v212 = vadd.f32 %v67, %v211
  %v213 = vpop.f32.mrb[0].mxu0
  %214 = vmatprep.mubr.f32.mxu0 0.0
  %215 = vmatmul.mubr.f32.gmra.mrb[0].mxu0 %v89
  %v216 = vpop.f32.mrb[0].mxu0
  %v217 = vadd.f32 %v72, %v216
  %v218 = vpop.f32.mrb[0].mxu0
  %219 = vmatprep.mubr.f32.mxu0 0.0
  %220 = vmatmul.mubr.f32.gmra.mrb[0].mxu0 %v92
  %v221 = vpop.f32.mrb[0].mxu0
  %v222 = vadd.f32 %v77, %v221
  %v223 = vpop.f32.mrb[0].mxu0
  %224 = vmatprep.mubr.f32.mxu0 0.0
  %225 = vmatmul.mubr.f32.gmra.mrb[0].mxu0 %v95
  %v226 = vpop.f32.mrb[0].mxu0
  %v227 = vadd.f32 %v82, %v226
  %v228 = vpop.f32.mrb[0].mxu0
  %229 = vdwg.mxu0
  %v230 = vmax.f32 %v212, 0.0
  %v231 = vmax.f32 %v217, 0.0
  %v232 = vmax.f32 %v222, 0.0
  %v233 = vmax.f32 %v227, 0.0
  %v234 = vadd.f32 %v230, %v231
  %v235 = vadd.f32 %v234, %v232
  %v236 = vadd.f32 %v235, %v233
  %v237 = vrot.slane %v236, 4
  %v238 = vadd.f32 %v236, %v237
  %v239 = vrot.slane %v238, 2
  %v240 = vadd.f32 %v238, %v239
  %v241 = vrot.slane %v240, 1
  %v242 = vadd.f32 %v240, %v241
  %v243 = vrcp.pop 32.0
  %v244 = vmul.f32 %v242, %v243
  %v245 = vsub.f32 %v230, %v244
  %v246 = vsub.f32 %v231, %v244
  %v247 = vsub.f32 %v232, %v244
  %v248 = vsub.f32 %v233, %v244
  %v249 = vmul.f32 %v245, %v245
  %v250 = vmul.f32 %v246, %v246
  %v251 = vmul.f32 %v247, %v247
  %v252 = vmul.f32 %v248, %v248
  %v253 = vadd.f32 %v249, %v250
  %v254 = vadd.f32 %v253, %v251
  %v255 = vadd.f32 %v254, %v252
  %v256 = vrot.slane %v255, 4
  %v257 = vadd.f32 %v255, %v256
  %v258 = vrot.slane %v257, 2
  %v259 = vadd.f32 %v257, %v258
  %v260 = vrot.slane %v259, 1
  %v261 = vadd.f32 %v259, %v260
  %v262 = vmul.f32 %v261, %v243
  %v263 = vadd.f32 %v262, 1e-05
  %v264 = vrsqrt.pop %v263
  %v265 = vmul.f32 %v245, %v264
  %v266 = vmul.f32 %v246, %v264
  %v267 = vmul.f32 %v247, %v264
  %v268 = vmul.f32 %v248, %v264
  %270 = vset.pattern.permute.xlu0 0
  %271 = vperm.xlu0 %270, %v35
  %v272 = vpop.permute.xlu0 %271
  %275 = vset.pattern.permute.xlu0 0
  %276 = vperm.xlu0 %275, %v36
  %v277 = vpop.permute.xlu0 %276
  %280 = vset.pattern.permute.xlu0 0
  %281 = vperm.xlu0 %280, %v37
  %v282 = vpop.permute.xlu0 %281
  %285 = vset.pattern.permute.xlu0 0
  %286 = vperm.xlu0 %285, %v38
  %v287 = vpop.permute.xlu0 %286
  %v289 = vmul.f32 %v265, %v272
  %v290 = vmul.f32 %v266, %v277
  %v291 = vmul.f32 %v267, %v282
  %v292 = vmul.f32 %v268, %v287
  %294 = vset.pattern.permute.xlu0 0
  %295 = vperm.xlu0 %294, %v39
  %v296 = vpop.permute.xlu0 %295
  %299 = vset.pattern.permute.xlu0 0
  %300 = vperm.xlu0 %299, %v40
  %v301 = vpop.permute.xlu0 %300
  %304 = vset.pattern.permute.xlu0 0
  %305 = vperm.xlu0 %304, %v41
  %v306 = vpop.permute.xlu0 %305
  %309 = vset.pattern.permute.xlu0 0
  %310 = vperm.xlu0 %309, %v42
  %v311 = vpop.permute.xlu0 %310
  %v313 = vadd.f32 %v289, %v296
  %v314 = vadd.f32 %v290, %v301
  %v315 = vadd.f32 %v291, %v306
  %v316 = vadd.f32 %v292, %v311
  %318 = vset.pattern.permute.xlu0 0
  %319 = vperm.xlu0 %318, %v43
  %v320 = vpop.permute.xlu0 %319
  %323 = vset.pattern.permute.xlu0 0
  %324 = vperm.xlu0 %323, %v44
  %v325 = vpop.permute.xlu0 %324
  %328 = vset.pattern.permute.xlu0 0
  %329 = vperm.xlu0 %328, %v45
  %v330 = vpop.permute.xlu0 %329
  %333 = vset.pattern.permute.xlu0 0
  %334 = vperm.xlu0 %333, %v46
  %v335 = vpop.permute.xlu0 %334
  %v337 = vmul.f32 %v313, %v320
  %v338 = vmul.f32 %v314, %v325
  %v339 = vmul.f32 %v315, %v330
  %v340 = vmul.f32 %v316, %v335
  %v341 = vadd.f32 %v337, %v338
  %v342 = vadd.f32 %v341, %v339
  %v343 = vadd.f32 %v342, %v340
  %v344 = vrot.slane %v343, 4
  %v345 = vadd.f32 %v343, %v344
  %v346 = vrot.slane %v345, 2
  %v347 = vadd.f32 %v345, %v346
  %v348 = vrot.slane %v347, 1
  %v349 = vadd.f32 %v347, %v348
  %v350 = vstv %s47
  %v351 = vadd.f32 %v349, %v350
  %352 = vst [vmem:[%s7] sm:$0x1] %v351
  // Predicated region
  $region30: #{regress_pred.1} parent=0 // pred_check
    _
  $region31: #{regress_pred.1} parent=0 // pred_check_branch
    %354 = sbr.rel (0) target = $region33
  $region32: #{regress_pred.1} parent=0 // pred_region
    _
  $region33: #{regress_pred.1} parent=0 // pred_fallthru
    _
  // Predicated region
  $region34: #{regress_pred.1} parent=0 // pred_check
    _
  $region35: #{regress_pred.1} parent=0 // pred_check_branch
    %356 = sbr.rel (0) target = $region37
  $region36: #{regress_pred.1} parent=0 // pred_region
    _
  $region37: #{regress_pred.1} parent=0 // pred_fallthru
    _

</llo_original>
